<compile_context>
chip_gen: v6e
topology: v6e:2x2x1
jax: 0.10.0
libtpu: 0.0.40
codegen_flags: <defaults>
</compile_context>

<pallas_src>
import functools

import jax
import jax.numpy as jnp
from jax.experimental import pallas as pl
from jax.experimental.pallas import tpu as pltpu

_LANE = 128  # label-dim padding -> lane-dense logits / argmax / output store


# ---------------------------------------------------------------------------
# Fused kernel: 3x DotAttentionLayer + concat + Linear(no bias) + argmax
# ---------------------------------------------------------------------------
def _fused_classify_kernel(len_ref,          # SMEM (B, 3) int32: word / e1 / e2 lengths
                           hidden_ref,       # (Bt, S,  H)  f32
                           e1_ref, e2_ref,   # (Bt, Se, De) f32 (gathered entity embeddings)
                           side_t_ref,       # (Bt, 2*Dt)   f32  = [e1_type | e2_type]
                           side_n_ref,       # (Bt, Dtn+Den) f32 = [tok_num_betw | et_num]
                           attn_w_ref,       # (1, H)  f32   Linear(H, 1) weight
                           dot_w_ref,        # (1, De) f32   Linear(De, 1) weight
                           lin_w_ref,        # (F, 128) f32  padded Linear(F, L) weight^T
                           tag_ref,          # out (Bt, 128) int32
                           *, label_size):
    i = pl.program_id(0)
    hidden = hidden_ref[...]
    Bt = hidden.shape[0]
    base = i * Bt

    def length_column(col):
        # Gather Bt scalar lengths from SMEM into a (Bt, 1) int32 column
        # using only scalar-broadcast selects (no cross-lane ops).
        row_iota = jax.lax.broadcasted_iota(jnp.int32, (Bt, 1), 0)
        out = jnp.zeros((Bt, 1), jnp.int32)
        for r in range(Bt):                       # Bt is a small compile-time constant
            out = out + jnp.where(row_iota == r, len_ref[base + r, col], 0)
        return out

    def attend(x, w_row, lengths_col):
        """DotAttentionLayer: masked softmax over seq then weighted sum."""
        Bx, Sx, Dx = x.shape
        # logits[b, s] = <x[b, s, :], w>
        logits = jnp.sum(x * w_row.reshape(1, 1, Dx), axis=2)          # (Bx, Sx)
        m = jnp.max(logits, axis=1, keepdims=True)
        # softmax -> mask -> renormalize.  The softmax denominator cancels in
        # the renormalization, so we skip it (identical math to the module).
        p = jnp.exp(logits - m)
        col_iota = jax.lax.broadcasted_iota(jnp.int32, (Bx, Sx), 1)
        p = p * (col_iota < lengths_col).astype(jnp.float32)
        p = p * pl.reciprocal(jnp.sum(p, axis=1, keepdims=True), approx=True)
        # weighted sum over seq on the MXU: (Bx,1,Sx) @ (Bx,Sx,Dx) -> (Bx,1,Dx)
        pooled = jnp.einsum('bqs,bsd->bqd', p[:, None, :], x,
                            preferred_element_type=jnp.float32)
        return pooled[:, 0, :]

    hf = attend(hidden, attn_w_ref[...], length_column(0))             # (Bt, H)
    e1 = attend(e1_ref[...], dot_w_ref[...], length_column(1))         # (Bt, De)
    e2 = attend(e2_ref[...], dot_w_ref[...], length_column(2))         # (Bt, De)

    # concat in the PyTorch order: hidden, e1_t, e2_t, e1, e2, tok_num, et_num
    x = jnp.concatenate([hf, side_t_ref[...], e1, e2, side_n_ref[...]], axis=1)

    # final Linear(F, L, bias=False) on the MXU (labels zero-padded to 128 lanes)
    outs = jnp.dot(x, lin_w_ref[...], preferred_element_type=jnp.float32)  # (Bt, 128)
    cols = jax.lax.broadcasted_iota(jnp.int32, outs.shape, 1)
    outs = jnp.where(cols < label_size, outs, jnp.finfo(jnp.float32).min)
    max_val = jnp.max(outs, axis=1, keepdims=True)
    idx = jnp.min(jnp.where(outs == max_val, cols, jnp.int32(outs.shape[1])),
                  axis=1, keepdims=True)                                   # (Bt, 1) first-max
    tag_ref[...] = jnp.broadcast_to(idx, tag_ref.shape)                    # lane-dense store


# ---------------------------------------------------------------------------
# ClassifyModel.forward
# ---------------------------------------------------------------------------
def classify_forward(params, hidden, word_seq_lengths,
                     e1_token, e1_length, e2_token, e2_length,
                     e1_type, e2_type, tok_num_betw, et_num):
    B, S, H = hidden.shape

    # embedding gathers (XLA glue feeding the fused kernel)
    e1_t = params["entity_type_emb"][e1_type]                       # (B, Dt)
    e2_t = params["entity_type_emb"][e2_type]                       # (B, Dt)
    e1_seq = params["entity_emb"][e1_token].astype(jnp.float32)     # (B, Se, De)
    e2_seq = params["entity_emb"][e2_token].astype(jnp.float32)     # (B, Se, De)
    v_tok = params["tok_num_betw_emb"][tok_num_betw]                # (B, Dtn)
    v_et = params["et_num_emb"][et_num]                             # (B, Den)

    side_t = jnp.concatenate([e1_t, e2_t], axis=1).astype(jnp.float32)
    side_n = jnp.concatenate([v_tok, v_et], axis=1).astype(jnp.float32)

    Se, De = e1_seq.shape[1], e1_seq.shape[2]
    lin_w = params["linear_w_t"].astype(jnp.float32)                # (F, L)
    F, L = lin_w.shape
    lin_w_pad = jnp.zeros((F, _LANE), jnp.float32).at[:, :L].set(lin_w)

    # all lengths packed into one scalar-prefetch (SMEM) array
    lengths = jnp.stack(
        [word_seq_lengths, e1_length, e2_length], axis=1).astype(jnp.int32)  # (B, 3)

    # batch tiling: 8-row blocks when possible, otherwise one block
    Bt = 8 if (B % 8 == 0) else B
    grid = (B // Bt,)

    kernel = functools.partial(_fused_classify_kernel, label_size=L)

    tag_pad = pl.pallas_call(
        kernel,
        out_shape=jax.ShapeDtypeStruct((B, _LANE), jnp.int32),
        grid_spec=pltpu.PrefetchScalarGridSpec(
            num_scalar_prefetch=1,
            grid=grid,
            in_specs=[
                pl.BlockSpec((Bt, S, H), lambda i, lens: (i, 0, 0)),
                pl.BlockSpec((Bt, Se, De), lambda i, lens: (i, 0, 0)),
                pl.BlockSpec((Bt, Se, De), lambda i, lens: (i, 0, 0)),
                pl.BlockSpec((Bt, side_t.shape[1]), lambda i, lens: (i, 0)),
                pl.BlockSpec((Bt, side_n.shape[1]), lambda i, lens: (i, 0)),
                pl.BlockSpec((1, H), lambda i, lens: (0, 0)),
                pl.BlockSpec((1, De), lambda i, lens: (0, 0)),
                pl.BlockSpec((F, _LANE), lambda i, lens: (0, 0)),
            ],
            out_specs=pl.BlockSpec((Bt, _LANE), lambda i, lens: (i, 0)),
        ),
        compiler_params=pltpu.CompilerParams(
            dimension_semantics=("parallel",)),
    )(lengths,
      hidden.astype(jnp.float32),
      e1_seq, e2_seq, side_t, side_n,
      params["attn_w"].reshape(1, H).astype(jnp.float32),
      params["dot_att_w"].reshape(1, De).astype(jnp.float32),
      lin_w_pad)

    return tag_pad[:, 0]


# ---------------------------------------------------------------------------
# deterministic parameter construction
# ---------------------------------------------------------------------------
def make_params(key, H, Dt, De, Dtn, Den,
                n_et, n_ent, n_tok, n_etnum, label_size, pad_idx):
    keys = jax.random.split(key, 8)

    def rand_embedding(k, vocab, dim):
        scale = jnp.sqrt(3.0 / dim)
        tbl = jax.random.uniform(k, (vocab, dim), jnp.float32, -scale, scale)
        return tbl.at[pad_idx].set(0.0)            # nn.Embedding padding_idx

    input_size = H + 2 * Dt + 2 * De + Dtn + Den
    params = {
        "attn_w": jax.random.normal(keys[0], (H,), jnp.float32) * 0.1,
        "dot_att_w": jax.random.normal(keys[1], (De,), jnp.float32) * 0.1,
        "entity_type_emb": rand_embedding(keys[2], n_et, Dt),
        "entity_emb": rand_embedding(keys[3], n_ent, De),
        "tok_num_betw_emb": rand_embedding(keys[4], n_tok, Dtn),
        "et_num_emb": rand_embedding(keys[5], n_etnum, Den),
        # Linear(input_size, label_size, bias=False); stored transposed (F, L)
        "linear_w_t": jax.random.normal(
            keys[6], (input_size, label_size), jnp.float32) * 0.1,
    }
    return params


if __name__ == "__main__":
    key = jax.random.PRNGKey(0)
    B, S, H = 2, 8, 32           # batch, seq len, HP_hidden_dim
    Se = 4                       # entity token seq length
    Dt, De, Dtn, Den = 8, 16, 8, 8
    n_et, n_ent, n_tok, n_etnum = 6, 20, 10, 10
    label_size = 5
    pad_idx = 0

    pkey, *ikeys = jax.random.split(key, 12)
    params = make_params(pkey, H, Dt, De, Dtn, Den,
                         n_et, n_ent, n_tok, n_etnum, label_size, pad_idx)

    hidden = jax.random.normal(ikeys[0], (B, S, H), jnp.float32)
    word_seq_lengths = jax.random.randint(ikeys[1], (B,), 1, S + 1)
    e1_token = jax.random.randint(ikeys[2], (B, Se), 1, n_ent)
    e2_token = jax.random.randint(ikeys[3], (B, Se), 1, n_ent)
    e1_length = jax.random.randint(ikeys[4], (B,), 1, Se + 1)
    e2_length = jax.random.randint(ikeys[5], (B,), 1, Se + 1)
    e1_type = jax.random.randint(ikeys[6], (B,), 1, n_et)
    e2_type = jax.random.randint(ikeys[7], (B,), 1, n_et)
    tok_num_betw = jax.random.randint(ikeys[8], (B,), 1, n_tok)
    et_num = jax.random.randint(ikeys[9], (B,), 1, n_etnum)

    forward = jax.jit(classify_forward)
    tag_seq = forward(params, hidden, word_seq_lengths,
                      e1_token, e1_length, e2_token, e2_length,
                      e1_type, e2_type, tok_num_betw, et_num)
    tag_seq = jax.block_until_ready(tag_seq)

    # sanity: predictions are valid label indices
    assert tag_seq.shape == (B,)
    assert bool(jnp.all((tag_seq >= 0) & (tag_seq < label_size)))
    print("KERNEL_OK")
</pallas_src>

<mosaic_0001>
module attributes {stable_mosaic.version = 11 : i64} {
  func.func @_fused_classify_kernel(%arg0: i32, %arg1: memref<2x3xi32, #tpu.memory_space<smem>>, %arg2: memref<2x8x32xf32, #tpu.memory_space<vmem>>, %arg3: memref<2x4x16xf32, #tpu.memory_space<vmem>>, %arg4: memref<2x4x16xf32, #tpu.memory_space<vmem>>, %arg5: memref<2x16xf32, #tpu.memory_space<vmem>>, %arg6: memref<2x16xf32, #tpu.memory_space<vmem>>, %arg7: memref<1x32xf32, #tpu.memory_space<vmem>>, %arg8: memref<1x16xf32, #tpu.memory_space<vmem>>, %arg9: memref<96x128xf32, #tpu.memory_space<vmem>>, %arg10: memref<2x128xi32, #tpu.memory_space<vmem>>) attributes {dimension_semantics = [#tpu.dimension_semantics<parallel>], iteration_bounds = array<i64: 1>, scalar_prefetch = 1 : i64, scratch_operands = 0 : i64, tpu.core_type = #tpu.core_type<tc>, window_params = [{transform_indices = @transform_0, window_bounds = array<i64: 2, 8, 32>}, {transform_indices = @transform_1, window_bounds = array<i64: 2, 4, 16>}, {transform_indices = @transform_2, window_bounds = array<i64: 2, 4, 16>}, {transform_indices = @transform_3, window_bounds = array<i64: 2, 16>}, {transform_indices = @transform_4, window_bounds = array<i64: 2, 16>}, {pipeline_mode = #tpu.pipeline_mode<synchronous>, transform_indices = @transform_5, window_bounds = array<i64: 1, 32>}, {pipeline_mode = #tpu.pipeline_mode<synchronous>, transform_indices = @transform_6, window_bounds = array<i64: 1, 16>}, {pipeline_mode = #tpu.pipeline_mode<synchronous>, transform_indices = @transform_7, window_bounds = array<i64: 96, 128>}, {transform_indices = @transform_8, window_bounds = array<i64: 2, 128>}]} {
    %c0 = arith.constant 0 : index
    %c0_0 = arith.constant 0 : index
    %c0_1 = arith.constant 0 : index
    %0 = vector.load %arg2[%c0, %c0_0, %c0_1] : memref<2x8x32xf32, #tpu.memory_space<vmem>>, vector<2x8x32xf32>
    %c2_i32 = arith.constant 2 : i32
    %1 = arith.muli %arg0, %c2_i32 : i32
    %c0_2 = arith.constant 0 : index
    %c0_3 = arith.constant 0 : index
    %2 = vector.load %arg7[%c0_2, %c0_3] : memref<1x32xf32, #tpu.memory_space<vmem>>, vector<1x32xf32>
    %3 = tpu.iota {dimensions = array<i32: 0>} : vector<2x1xi32>
    %c0_i32 = arith.constant 0 : i32
    %4 = vector.broadcast %c0_i32 : i32 to vector<2x1xi32>
    %c0_i32_4 = arith.constant 0 : i32
    %5 = vector.broadcast %c0_i32_4 : i32 to vector<2x1xi32>
    %6 = arith.cmpi eq, %3, %5 : vector<2x1xi32>
    %c0_i32_5 = arith.constant 0 : i32
    %7 = arith.addi %1, %c0_i32_5 : i32
    %8 = arith.index_cast %7 : i32 to index
    %c0_6 = arith.constant 0 : index
    %9 = memref.load %arg1[%8, %c0_6] : memref<2x3xi32, #tpu.memory_space<smem>>
    %c0_i32_7 = arith.constant 0 : i32
    %10 = vector.broadcast %9 : i32 to vector<2x1xi32>
    %11 = vector.broadcast %c0_i32_7 : i32 to vector<2x1xi32>
    %12 = arith.select %6, %10, %11 : vector<2x1xi1>, vector<2x1xi32>
    %13 = arith.addi %4, %12 : vector<2x1xi32>
    %c1_i32 = arith.constant 1 : i32
    %14 = vector.broadcast %c1_i32 : i32 to vector<2x1xi32>
    %15 = arith.cmpi eq, %3, %14 : vector<2x1xi32>
    %c1_i32_8 = arith.constant 1 : i32
    %16 = arith.addi %1, %c1_i32_8 : i32
    %17 = arith.index_cast %16 : i32 to index
    %c0_9 = arith.constant 0 : index
    %18 = memref.load %arg1[%17, %c0_9] : memref<2x3xi32, #tpu.memory_space<smem>>
    %c0_i32_10 = arith.constant 0 : i32
    %19 = vector.broadcast %18 : i32 to vector<2x1xi32>
    %20 = vector.broadcast %c0_i32_10 : i32 to vector<2x1xi32>
    %21 = arith.select %15, %19, %20 : vector<2x1xi1>, vector<2x1xi32>
    %22 = arith.addi %13, %21 : vector<2x1xi32>
    %23 = vector.shape_cast %2 : vector<1x32xf32> to vector<1x1x32xf32>
    %24 = vector.broadcast %23 : vector<1x1x32xf32> to vector<2x8x32xf32>
    %25 = arith.mulf %0, %24 : vector<2x8x32xf32>
    %cst = arith.constant dense<0.000000e+00> : vector<2x8xf32>
    %26 = vector.multi_reduction <add>, %25, %cst [2] : vector<2x8x32xf32> to vector<2x8xf32>
    %cst_11 = arith.constant dense<0xFF800000> : vector<2xf32>
    %27 = vector.multi_reduction <maximumf>, %26, %cst_11 [1] : vector<2x8xf32> to vector<2xf32>
    %28 = vector.shape_cast %27 : vector<2xf32> to vector<2x1xf32>
    %29 = vector.broadcast %28 : vector<2x1xf32> to vector<2x8xf32>
    %30 = arith.subf %26, %29 : vector<2x8xf32>
    %31 = math.exp %30 : vector<2x8xf32>
    %32 = tpu.iota {dimensions = array<i32: 1>} : vector<2x8xi32>
    %33 = vector.broadcast %22 : vector<2x1xi32> to vector<2x8xi32>
    %34 = arith.cmpi slt, %32, %33 : vector<2x8xi32>
    %35 = arith.extui %34 : vector<2x8xi1> to vector<2x8xi32>
    %36 = arith.sitofp %35 : vector<2x8xi32> to vector<2x8xf32>
    %37 = arith.mulf %31, %36 : vector<2x8xf32>
    %cst_12 = arith.constant dense<0.000000e+00> : vector<2xf32>
    %38 = vector.multi_reduction <add>, %37, %cst_12 [1] : vector<2x8xf32> to vector<2xf32>
    %39 = vector.shape_cast %38 : vector<2xf32> to vector<2x1xf32>
    %40 = tpu.reciprocal %39 {approx = true} : vector<2x1xf32> -> vector<2x1xf32>
    %41 = vector.broadcast %40 : vector<2x1xf32> to vector<2x8xf32>
    %42 = arith.mulf %37, %41 : vector<2x8xf32>
    %43 = vector.shape_cast %42 : vector<2x8xf32> to vector<2x1x8xf32>
    "tpu.trace_start"() <{level = 10 : i32, message = "bqs,bsd->bqd"}> : () -> ()
    %cst_13 = arith.constant dense<0.000000e+00> : vector<2x1x32xf32>
    %44 = tpu.matmul %43, %0, %cst_13 {dimension_numbers = #tpu.dot_dimension_numbers<[2], [1], [1], [2], [0, 0, 0, 1, 1, 2], [0], [0]>} : vector<2x1x8xf32>, vector<2x8x32xf32>, vector<2x1x32xf32> -> vector<2x1x32xf32>
    "tpu.trace_stop"() : () -> ()
    %45 = vector.shape_cast %44 : vector<2x1x32xf32> to vector<2x32xf32>
    %c0_14 = arith.constant 0 : index
    %c0_15 = arith.constant 0 : index
    %c0_16 = arith.constant 0 : index
    %46 = vector.load %arg3[%c0_14, %c0_15, %c0_16] : memref<2x4x16xf32, #tpu.memory_space<vmem>>, vector<2x4x16xf32>
    %c0_17 = arith.constant 0 : index
    %c0_18 = arith.constant 0 : index
    %47 = vector.load %arg8[%c0_17, %c0_18] : memref<1x16xf32, #tpu.memory_space<vmem>>, vector<1x16xf32>
    %48 = tpu.iota {dimensions = array<i32: 0>} : vector<2x1xi32>
    %c0_i32_19 = arith.constant 0 : i32
    %49 = vector.broadcast %c0_i32_19 : i32 to vector<2x1xi32>
    %c0_i32_20 = arith.constant 0 : i32
    %50 = vector.broadcast %c0_i32_20 : i32 to vector<2x1xi32>
    %51 = arith.cmpi eq, %48, %50 : vector<2x1xi32>
    %c0_i32_21 = arith.constant 0 : i32
    %52 = arith.addi %1, %c0_i32_21 : i32
    %53 = arith.index_cast %52 : i32 to index
    %c1 = arith.constant 1 : index
    %54 = memref.load %arg1[%53, %c1] : memref<2x3xi32, #tpu.memory_space<smem>>
    %c0_i32_22 = arith.constant 0 : i32
    %55 = vector.broadcast %54 : i32 to vector<2x1xi32>
    %56 = vector.broadcast %c0_i32_22 : i32 to vector<2x1xi32>
    %57 = arith.select %51, %55, %56 : vector<2x1xi1>, vector<2x1xi32>
    %58 = arith.addi %49, %57 : vector<2x1xi32>
    %c1_i32_23 = arith.constant 1 : i32
    %59 = vector.broadcast %c1_i32_23 : i32 to vector<2x1xi32>
    %60 = arith.cmpi eq, %48, %59 : vector<2x1xi32>
    %c1_i32_24 = arith.constant 1 : i32
    %61 = arith.addi %1, %c1_i32_24 : i32
    %62 = arith.index_cast %61 : i32 to index
    %c1_25 = arith.constant 1 : index
    %63 = memref.load %arg1[%62, %c1_25] : memref<2x3xi32, #tpu.memory_space<smem>>
    %c0_i32_26 = arith.constant 0 : i32
    %64 = vector.broadcast %63 : i32 to vector<2x1xi32>
    %65 = vector.broadcast %c0_i32_26 : i32 to vector<2x1xi32>
    %66 = arith.select %60, %64, %65 : vector<2x1xi1>, vector<2x1xi32>
    %67 = arith.addi %58, %66 : vector<2x1xi32>
    %68 = vector.shape_cast %47 : vector<1x16xf32> to vector<1x1x16xf32>
    %69 = vector.broadcast %68 : vector<1x1x16xf32> to vector<2x4x16xf32>
    %70 = arith.mulf %46, %69 : vector<2x4x16xf32>
    %cst_27 = arith.constant dense<0.000000e+00> : vector<2x4xf32>
    %71 = vector.multi_reduction <add>, %70, %cst_27 [2] : vector<2x4x16xf32> to vector<2x4xf32>
    %cst_28 = arith.constant dense<0xFF800000> : vector<2xf32>
    %72 = vector.multi_reduction <maximumf>, %71, %cst_28 [1] : vector<2x4xf32> to vector<2xf32>
    %73 = vector.shape_cast %72 : vector<2xf32> to vector<2x1xf32>
    %74 = vector.broadcast %73 : vector<2x1xf32> to vector<2x4xf32>
    %75 = arith.subf %71, %74 : vector<2x4xf32>
    %76 = math.exp %75 : vector<2x4xf32>
    %77 = tpu.iota {dimensions = array<i32: 1>} : vector<2x4xi32>
    %78 = vector.broadcast %67 : vector<2x1xi32> to vector<2x4xi32>
    %79 = arith.cmpi slt, %77, %78 : vector<2x4xi32>
    %80 = arith.extui %79 : vector<2x4xi1> to vector<2x4xi32>
    %81 = arith.sitofp %80 : vector<2x4xi32> to vector<2x4xf32>
    %82 = arith.mulf %76, %81 : vector<2x4xf32>
    %cst_29 = arith.constant dense<0.000000e+00> : vector<2xf32>
    %83 = vector.multi_reduction <add>, %82, %cst_29 [1] : vector<2x4xf32> to vector<2xf32>
    %84 = vector.shape_cast %83 : vector<2xf32> to vector<2x1xf32>
    %85 = tpu.reciprocal %84 {approx = true} : vector<2x1xf32> -> vector<2x1xf32>
    %86 = vector.broadcast %85 : vector<2x1xf32> to vector<2x4xf32>
    %87 = arith.mulf %82, %86 : vector<2x4xf32>
    %88 = vector.shape_cast %87 : vector<2x4xf32> to vector<2x1x4xf32>
    "tpu.trace_start"() <{level = 10 : i32, message = "bqs,bsd->bqd"}> : () -> ()
    %cst_30 = arith.constant dense<0.000000e+00> : vector<2x1x16xf32>
    %89 = tpu.matmul %88, %46, %cst_30 {dimension_numbers = #tpu.dot_dimension_numbers<[2], [1], [1], [2], [0, 0, 0, 1, 1, 2], [0], [0]>} : vector<2x1x4xf32>, vector<2x4x16xf32>, vector<2x1x16xf32> -> vector<2x1x16xf32>
    "tpu.trace_stop"() : () -> ()
    %90 = vector.shape_cast %89 : vector<2x1x16xf32> to vector<2x16xf32>
    %c0_31 = arith.constant 0 : index
    %c0_32 = arith.constant 0 : index
    %c0_33 = arith.constant 0 : index
    %91 = vector.load %arg4[%c0_31, %c0_32, %c0_33] : memref<2x4x16xf32, #tpu.memory_space<vmem>>, vector<2x4x16xf32>
    %c0_34 = arith.constant 0 : index
    %c0_35 = arith.constant 0 : index
    %92 = vector.load %arg8[%c0_34, %c0_35] : memref<1x16xf32, #tpu.memory_space<vmem>>, vector<1x16xf32>
    %93 = tpu.iota {dimensions = array<i32: 0>} : vector<2x1xi32>
    %c0_i32_36 = arith.constant 0 : i32
    %94 = vector.broadcast %c0_i32_36 : i32 to vector<2x1xi32>
    %c0_i32_37 = arith.constant 0 : i32
    %95 = vector.broadcast %c0_i32_37 : i32 to vector<2x1xi32>
    %96 = arith.cmpi eq, %93, %95 : vector<2x1xi32>
    %c0_i32_38 = arith.constant 0 : i32
    %97 = arith.addi %1, %c0_i32_38 : i32
    %98 = arith.index_cast %97 : i32 to index
    %c2 = arith.constant 2 : index
    %99 = memref.load %arg1[%98, %c2] : memref<2x3xi32, #tpu.memory_space<smem>>
    %c0_i32_39 = arith.constant 0 : i32
    %100 = vector.broadcast %99 : i32 to vector<2x1xi32>
    %101 = vector.broadcast %c0_i32_39 : i32 to vector<2x1xi32>
    %102 = arith.select %96, %100, %101 : vector<2x1xi1>, vector<2x1xi32>
    %103 = arith.addi %94, %102 : vector<2x1xi32>
    %c1_i32_40 = arith.constant 1 : i32
    %104 = vector.broadcast %c1_i32_40 : i32 to vector<2x1xi32>
    %105 = arith.cmpi eq, %93, %104 : vector<2x1xi32>
    %c1_i32_41 = arith.constant 1 : i32
    %106 = arith.addi %1, %c1_i32_41 : i32
    %107 = arith.index_cast %106 : i32 to index
    %c2_42 = arith.constant 2 : index
    %108 = memref.load %arg1[%107, %c2_42] : memref<2x3xi32, #tpu.memory_space<smem>>
    %c0_i32_43 = arith.constant 0 : i32
    %109 = vector.broadcast %108 : i32 to vector<2x1xi32>
    %110 = vector.broadcast %c0_i32_43 : i32 to vector<2x1xi32>
    %111 = arith.select %105, %109, %110 : vector<2x1xi1>, vector<2x1xi32>
    %112 = arith.addi %103, %111 : vector<2x1xi32>
    %113 = vector.shape_cast %92 : vector<1x16xf32> to vector<1x1x16xf32>
    %114 = vector.broadcast %113 : vector<1x1x16xf32> to vector<2x4x16xf32>
    %115 = arith.mulf %91, %114 : vector<2x4x16xf32>
    %cst_44 = arith.constant dense<0.000000e+00> : vector<2x4xf32>
    %116 = vector.multi_reduction <add>, %115, %cst_44 [2] : vector<2x4x16xf32> to vector<2x4xf32>
    %cst_45 = arith.constant dense<0xFF800000> : vector<2xf32>
    %117 = vector.multi_reduction <maximumf>, %116, %cst_45 [1] : vector<2x4xf32> to vector<2xf32>
    %118 = vector.shape_cast %117 : vector<2xf32> to vector<2x1xf32>
    %119 = vector.broadcast %118 : vector<2x1xf32> to vector<2x4xf32>
    %120 = arith.subf %116, %119 : vector<2x4xf32>
    %121 = math.exp %120 : vector<2x4xf32>
    %122 = tpu.iota {dimensions = array<i32: 1>} : vector<2x4xi32>
    %123 = vector.broadcast %112 : vector<2x1xi32> to vector<2x4xi32>
    %124 = arith.cmpi slt, %122, %123 : vector<2x4xi32>
    %125 = arith.extui %124 : vector<2x4xi1> to vector<2x4xi32>
    %126 = arith.sitofp %125 : vector<2x4xi32> to vector<2x4xf32>
    %127 = arith.mulf %121, %126 : vector<2x4xf32>
    %cst_46 = arith.constant dense<0.000000e+00> : vector<2xf32>
    %128 = vector.multi_reduction <add>, %127, %cst_46 [1] : vector<2x4xf32> to vector<2xf32>
    %129 = vector.shape_cast %128 : vector<2xf32> to vector<2x1xf32>
    %130 = tpu.reciprocal %129 {approx = true} : vector<2x1xf32> -> vector<2x1xf32>
    %131 = vector.broadcast %130 : vector<2x1xf32> to vector<2x4xf32>
    %132 = arith.mulf %127, %131 : vector<2x4xf32>
    %133 = vector.shape_cast %132 : vector<2x4xf32> to vector<2x1x4xf32>
    "tpu.trace_start"() <{level = 10 : i32, message = "bqs,bsd->bqd"}> : () -> ()
    %cst_47 = arith.constant dense<0.000000e+00> : vector<2x1x16xf32>
    %134 = tpu.matmul %133, %91, %cst_47 {dimension_numbers = #tpu.dot_dimension_numbers<[2], [1], [1], [2], [0, 0, 0, 1, 1, 2], [0], [0]>} : vector<2x1x4xf32>, vector<2x4x16xf32>, vector<2x1x16xf32> -> vector<2x1x16xf32>
    "tpu.trace_stop"() : () -> ()
    %135 = vector.shape_cast %134 : vector<2x1x16xf32> to vector<2x16xf32>
    %c0_48 = arith.constant 0 : index
    %c0_49 = arith.constant 0 : index
    %136 = vector.load %arg5[%c0_48, %c0_49] : memref<2x16xf32, #tpu.memory_space<vmem>>, vector<2x16xf32>
    %c0_50 = arith.constant 0 : index
    %c0_51 = arith.constant 0 : index
    %137 = vector.load %arg6[%c0_50, %c0_51] : memref<2x16xf32, #tpu.memory_space<vmem>>, vector<2x16xf32>
    %138 = tpu.concatenate %45, %136, %90, %135, %137 in 1 : vector<2x32xf32>, vector<2x16xf32>, vector<2x16xf32>, vector<2x16xf32>, vector<2x16xf32> -> vector<2x96xf32>
    %c0_52 = arith.constant 0 : index
    %c0_53 = arith.constant 0 : index
    %139 = vector.load %arg9[%c0_52, %c0_53] : memref<96x128xf32, #tpu.memory_space<vmem>>, vector<96x128xf32>
    %cst_54 = arith.constant dense<0.000000e+00> : vector<2x128xf32>
    %140 = tpu.matmul %138, %139, %cst_54 {dimension_numbers = #tpu.dot_dimension_numbers<[1], [0], [0], [1], [0, 0, 1, 1], [], []>} : vector<2x96xf32>, vector<96x128xf32>, vector<2x128xf32> -> vector<2x128xf32>
    %141 = tpu.iota {dimensions = array<i32: 1>} : vector<2x128xi32>
    %c5_i32 = arith.constant 5 : i32
    %142 = vector.broadcast %c5_i32 : i32 to vector<2x128xi32>
    %143 = arith.cmpi slt, %141, %142 : vector<2x128xi32>
    %cst_55 = arith.constant -3.40282347E+38 : f32
    %144 = vector.broadcast %cst_55 : f32 to vector<2x128xf32>
    %145 = arith.select %143, %140, %144 : vector<2x128xi1>, vector<2x128xf32>
    %cst_56 = arith.constant dense<0xFF800000> : vector<2xf32>
    %146 = vector.multi_reduction <maximumf>, %145, %cst_56 [1] : vector<2x128xf32> to vector<2xf32>
    %147 = vector.shape_cast %146 : vector<2xf32> to vector<2x1xf32>
    %148 = vector.broadcast %147 : vector<2x1xf32> to vector<2x128xf32>
    %149 = arith.cmpf oeq, %145, %148 : vector<2x128xf32>
    %c128_i32 = arith.constant 128 : i32
    %150 = vector.broadcast %c128_i32 : i32 to vector<2x128xi32>
    %151 = arith.select %149, %141, %150 : vector<2x128xi1>, vector<2x128xi32>
    %cst_57 = arith.constant dense<2147483647> : vector<2xi32>
    %152 = vector.multi_reduction <minsi>, %151, %cst_57 [1] : vector<2x128xi32> to vector<2xi32>
    %153 = vector.shape_cast %152 : vector<2xi32> to vector<2x1xi32>
    %154 = vector.shape_cast %153 : vector<2x1xi32> to vector<2x1xi32>
    %155 = vector.broadcast %154 : vector<2x1xi32> to vector<2x128xi32>
    %c0_58 = arith.constant 0 : index
    %c0_59 = arith.constant 0 : index
    %156 = vector.load %arg10[%c0_58, %c0_59] : memref<2x128xi32, #tpu.memory_space<vmem>>, vector<2x128xi32>
    tpu.vector_store %arg10[%c0_58, %c0_59], %155 {strides = array<i32>} : memref<2x128xi32, #tpu.memory_space<vmem>>, vector<2x128xi32>,
    return
  }
  func.func @transform_0(%arg0: i32, %arg1: memref<2x3xi32, #tpu.memory_space<smem>>) -> (i32, i32, i32) {
    %c0_i32 = arith.constant 0 : i32
    %c0_i32_0 = arith.constant 0 : i32
    %c0_i32_1 = arith.constant 0 : i32
    return %arg0, %c0_i32, %c0_i32_0 : i32, i32, i32
  }
  func.func @transform_1(%arg0: i32, %arg1: memref<2x3xi32, #tpu.memory_space<smem>>) -> (i32, i32, i32) {
    %c0_i32 = arith.constant 0 : i32
    %c0_i32_0 = arith.constant 0 : i32
    %c0_i32_1 = arith.constant 0 : i32
    return %arg0, %c0_i32, %c0_i32_0 : i32, i32, i32
  }
  func.func @transform_2(%arg0: i32, %arg1: memref<2x3xi32, #tpu.memory_space<smem>>) -> (i32, i32, i32) {
    %c0_i32 = arith.constant 0 : i32
    %c0_i32_0 = arith.constant 0 : i32
    %c0_i32_1 = arith.constant 0 : i32
    return %arg0, %c0_i32, %c0_i32_0 : i32, i32, i32
  }
  func.func @transform_3(%arg0: i32, %arg1: memref<2x3xi32, #tpu.memory_space<smem>>) -> (i32, i32) {
    %c0_i32 = arith.constant 0 : i32
    %c0_i32_0 = arith.constant 0 : i32
    return %arg0, %c0_i32 : i32, i32
  }
  func.func @transform_4(%arg0: i32, %arg1: memref<2x3xi32, #tpu.memory_space<smem>>) -> (i32, i32) {
    %c0_i32 = arith.constant 0 : i32
    %c0_i32_0 = arith.constant 0 : i32
    return %arg0, %c0_i32 : i32, i32
  }
  func.func @transform_5(%arg0: i32, %arg1: memref<2x3xi32, #tpu.memory_space<smem>>) -> (i32, i32) {
    %c0_i32 = arith.constant 0 : i32
    %c0_i32_0 = arith.constant 0 : i32
    %c0_i32_1 = arith.constant 0 : i32
    return %c0_i32, %c0_i32_0 : i32, i32
  }
  func.func @transform_6(%arg0: i32, %arg1: memref<2x3xi32, #tpu.memory_space<smem>>) -> (i32, i32) {
    %c0_i32 = arith.constant 0 : i32
    %c0_i32_0 = arith.constant 0 : i32
    %c0_i32_1 = arith.constant 0 : i32
    return %c0_i32, %c0_i32_0 : i32, i32
  }
  func.func @transform_7(%arg0: i32, %arg1: memref<2x3xi32, #tpu.memory_space<smem>>) -> (i32, i32) {
    %c0_i32 = arith.constant 0 : i32
    %c0_i32_0 = arith.constant 0 : i32
    %c0_i32_1 = arith.constant 0 : i32
    return %c0_i32, %c0_i32_0 : i32, i32
  }
  func.func @transform_8(%arg0: i32, %arg1: memref<2x3xi32, #tpu.memory_space<smem>>) -> (i32, i32) {
    %c0_i32 = arith.constant 0 : i32
    %c0_i32_0 = arith.constant 0 : i32
    return %arg0, %c0_i32 : i32, i32
  }
}

</mosaic_0001>

<llo_original>
// kernel: classify_forward.1
$region0: #{classify_forward.1}
  #allocation0 [shape = 'u32[]', space=smem, size = 0x4, offset = 0x4, fixed_abs, tag = 'smem constant byte address 0x4 - core index']
  #allocation1 [shape = 'u32[144,128]{1,0:T(1,128)}', space=vmem, size = 0x12000, scoped, tag = 'internal scratch']
  #allocation2 [shape = 's32[1]{0}', space=sflag, size = 0x4, scoped, tag = 'scoped memory for classify_forward.1']
  #allocation3 [shape = 'u8[1024]{0}', space=smem, size = 0x400, scoped, tag = 'prefetched SMEM operand 0']
  %s0 = inlined_call_operand.vmem [shape: s32[2,3], index: 0, kind: input, shape index: {}]
  %s1 = inlined_call_operand.vmem [shape: f32[2,8,32], index: 1, kind: input, shape index: {}]
  %s2 = inlined_call_operand.vmem [shape: f32[2,4,16], index: 2, kind: input, shape index: {}]
  %s3 = inlined_call_operand.vmem [shape: f32[2,4,16], index: 3, kind: input, shape index: {}]
  %s4 = inlined_call_operand.vmem [shape: f32[2,16], index: 4, kind: input, shape index: {}]
  %s5 = inlined_call_operand.vmem [shape: f32[2,16], index: 5, kind: input, shape index: {}]
  %s6 = inlined_call_operand.vmem [shape: f32[1,32], index: 6, kind: input, shape index: {}]
  %s7 = inlined_call_operand.vmem [shape: f32[1,16], index: 7, kind: input, shape index: {}]
  %s8 = inlined_call_operand.vmem [shape: f32[96,128], index: 8, kind: input, shape index: {}]
  %s9 = inlined_call_operand.vmem [shape: s32[2,128], index: 9, kind: output, shape index: {}]
  %s10 = sld [smem:[#allocation0]]
  $region42: #{classify_forward.1} parent=0
    _
  %s12 = ssub.s32 1, %s10
  %s13 = scalar_select 0, %s12, %s10
  %s14 = sshll.u32 %s0, 4
  %s15 = int_to_ptr.vmem [resolvable:$true] %s14
  %17 = dma.vmem_to_smem %s15, 32, [#allocation3], [#allocation2]
  %18 = dma.done [#allocation2], 32
  %19 = sfence
  // Predicated region
  $region2: #{classify_forward.1} parent=0 // pred_check
    _
  $region3: #{classify_forward.1} parent=0 // pred_check_branch
    %21 = sbr.rel (0) target = $region5
  $region4: #{classify_forward.1} parent=0 // pred_region
    _
  $region5: #{classify_forward.1} parent=0 // pred_fallthru
    _
  // Predicated region
  $region6: #{classify_forward.1} parent=0 // pred_check
    _
  $region7: #{classify_forward.1} parent=0 // pred_check_branch
    %23 = sbr.rel (0) target = $region9
  $region8: #{classify_forward.1} parent=0 // pred_region
    _
  $region9: #{classify_forward.1} parent=0 // pred_fallthru
    _
  // Predicated region
  $region10: #{classify_forward.1} parent=0 // pred_check
    _
  $region11: #{classify_forward.1} parent=0 // pred_check_branch
    %25 = sbr.rel (0) target = $region13
  $region12: #{classify_forward.1} parent=0 // pred_region
    _
  $region13: #{classify_forward.1} parent=0 // pred_fallthru
    _
  // Predicated region
  $region14: #{classify_forward.1} parent=0 // pred_check
    _
  $region15: #{classify_forward.1} parent=0 // pred_check_branch
    %27 = sbr.rel (0) target = $region17
  $region16: #{classify_forward.1} parent=0 // pred_region
    _
  $region17: #{classify_forward.1} parent=0 // pred_fallthru
    _
  // Predicated region
  $region18: #{classify_forward.1} parent=0 // pred_check
    _
  $region19: #{classify_forward.1} parent=0 // pred_check_branch
    %29 = sbr.rel (0) target = $region21
  $region20: #{classify_forward.1} parent=0 // pred_region
    _
  $region21: #{classify_forward.1} parent=0 // pred_fallthru
    _
  // Predicated region
  $region22: #{classify_forward.1} parent=0 // pred_check
    _
  $region23: #{classify_forward.1} parent=0 // pred_check_branch
    %31 = sbr.rel (0) target = $region25
  $region24: #{classify_forward.1} parent=0 // pred_region
    _
  $region25: #{classify_forward.1} parent=0 // pred_fallthru
    _
  // Predicated region
  $region26: #{classify_forward.1} parent=0 // pred_check
    _
  $region27: #{classify_forward.1} parent=0 // pred_check_branch
    %33 = sbr.rel (0) target = $region29
  $region28: #{classify_forward.1} parent=0 // pred_region
    _
  $region29: #{classify_forward.1} parent=0 // pred_fallthru
    _
  // Predicated region
  $region30: #{classify_forward.1} parent=0 // pred_check
    _
  $region31: #{classify_forward.1} parent=0 // pred_check_branch
    %35 = sbr.rel (0) target = $region33
  $region32: #{classify_forward.1} parent=0 // pred_region
    _
  $region33: #{classify_forward.1} parent=0 // pred_fallthru
    _
  %v36 = vld [vmem:[%s1] sm:$0xff]
  %v37 = vld [vmem:[%s1 + $0x8] sm:$0xff]
  %s38 = smul.u32 0, 2
  %v39 = vld [vmem:[%s6] sm:$0x1]
  %v40 = vlaneseq
  %v41 = vshrl.u32 %v40, 7
  %vm42 = vcmp.eq.s32.totalorder %v41, 0
  %s43 = smul.u32 %s38, 128
  %s44 = sld [smem:[#allocation3 + %s43]]
  %v45 = vstv %s44
  %v46 = vsel %vm42, %v45, 0
  %vm47 = vcmp.eq.s32.totalorder %v41, 1
  %s48 = sadd.s32 %s38, 1
  %s49 = smul.u32 %s48, 128
  %s50 = sld [smem:[#allocation3 + %s49]]
  %v51 = vstv %s50
  %v52 = vsel %vm47, %v51, 0
  %v53 = vadd.s32 %v46, %v52
  %v55 = vlaneseq
  %v56 = vshrl.u32 %v55, 7
  %v57 = vsub.s32 0, %v56
  %v58 = vrot.slane %v39, %v57
  %v60 = vmul.f32 %v36, %v58
  %v61 = vmul.f32 %v37, %v58
  %vm62 = vcmask 261120
  %v63 = vsel %vm62, %v60, 0.0
  %64 = vadd.xlane.f32.xlu0 %v63
  %v65 = vpop.xlane.xlu0 %64
  %v66 = vsel %vm62, %v61, 0.0
  %67 = vadd.xlane.f32.xlu0 %v66
  %v68 = vpop.xlane.xlu0 %67
  %v71 = vlaneseq
  %v72 = vand.u32 %v71, 127
  %v73 = vlaneseq
  %v74 = vshrl.u32 %v73, 7
  %v75 = vsub.s32 %v72, %v74
  %v76 = vrot.slane %v65, %v75
  %v77 = vlaneseq
  %v78 = vshrl.u32 %v77, 7
  %v79 = vsub.s32 %v72, %v78
  %v80 = vrot.slane %v68, %v79
  %vm81 = vcmask 1041409
  %v82 = vsel %vm81, %v80, %v76
  %vm84 = vcmask 58368
  %v85 = vsel %vm84, %v82, -inf
  %86 = vmax.xlane.f32.xlu0 %v85
  %v87 = vpop.xlane.xlu0 %86
  %v89 = vlaneseq
  %v90 = vshrl.u32 %v89, 7
  %v91 = vsub.s32 0, %v90
  %v92 = vrot.slane %v87, %v91
  %v93 = vlaneseq
  %v94 = vshrl.u32 %v93, 7
  %v95 = vsub.s32 1, %v94
  %v96 = vrot.slane %v87, %v95
  %v99 = vsub.f32 %v65, %v92
  %v100 = vsub.f32 %v68, %v96
  %v101 = vmul.f32 %v99, 1.442695
  %v102 = vpow.pop %v101
  %v103 = vmul.f32 %v100, 1.442695
  %v104 = vpow.pop %v103
  %vm105 = vcmp.lt.s32.totalorder %v72, %v53
  %v106 = vsel %vm105, 1, 0
  %v107 = vcvt.s32.f32 %v106
  %v109 = vlaneseq
  %v110 = vshrl.u32 %v109, 7
  %v111 = vsub.s32 0, %v110
  %v112 = vrot.slane %v107, %v111
  %114 = vbcast.lane.b32.xlu0 %v112, 256
  %v115 = vpop.permute.xlu0 %114
  %v116 = vlaneseq
  %v117 = vshrl.u32 %v116, 7
  %v118 = vsub.s32 1, %v117
  %v119 = vrot.slane %v107, %v118
  %121 = vbcast.lane.b32.xlu0 %v119, 256
  %v122 = vpop.permute.xlu0 %121
  %v125 = vmul.f32 %v102, %v115
  %v126 = vmul.f32 %v104, %v122
  %129 = vset.pattern.permute.xlu0 0
  %130 = vperm.xlu0 %129, %v125
  %v131 = vpop.permute.xlu0 %130
  %132 = vset.pattern.permute.xlu0 0
  %133 = vperm.xlu0 %132, %v126
  %v134 = vpop.permute.xlu0 %133
  %v135 = vlaneseq
  %v136 = vshrl.u32 %v135, 7
  %v137 = vsub.s32 %v72, %v136
  %v138 = vrot.slane %v131, %v137
  %v139 = vlaneseq
  %v140 = vshrl.u32 %v139, 7
  %v141 = vsub.s32 %v72, %v140
  %v142 = vrot.slane %v134, %v141
  %v143 = vsel %vm81, %v142, %v138
  %v145 = vsel %vm84, %v143, 0.0
  %146 = vadd.xlane.f32.xlu0 %v145
  %v147 = vpop.xlane.xlu0 %146
  %v148 = vrcp.pop %v147
  %v150 = vlaneseq
  %v151 = vshrl.u32 %v150, 7
  %v152 = vsub.s32 0, %v151
  %v153 = vrot.slane %v148, %v152
  %v154 = vlaneseq
  %v155 = vshrl.u32 %v154, 7
  %v156 = vsub.s32 1, %v155
  %v157 = vrot.slane %v148, %v156
  %v160 = vmul.f32 %v125, %v153
  %v161 = vmul.f32 %v126, %v157
  %163 = vset.pattern.permute.xlu0 0
  %164 = vperm.xlu0 %163, %v160
  %v165 = vpop.permute.xlu0 %164
  %v166 = vlaneseq
  %v167 = vshrl.u32 %v166, 7
  %v168 = vsub.s32 %v72, %v167
  %v169 = vrot.slane %v165, %v168
  %vm170 = vcmask 64512
  %v171 = vsel %vm170, %v169, 0
  %173 = vmatprep.subr.mxu0 0.0
  %174 = vmatpush1.msra.mxu0 0.0
  %175 = vmatprep.subr.mxu0 0.0
  %176 = vmatpush1.msra.mxu0 0.0
  %177 = vmatprep.subr.mxu0 0.0
  %178 = vmatpush1.msra.mxu0 0.0
  %179 = vmatprep.subr.mxu0 0.0
  %180 = vmatpush1.msra.mxu0 0.0
  %181 = vmatprep.subr.mxu0 0.0
  %182 = vmatpush1.msra.mxu0 0.0
  %183 = vmatprep.subr.mxu0 0.0
  %184 = vmatpush1.msra.mxu0 0.0
  %185 = vmatprep.subr.mxu0 0.0
  %186 = vmatpush1.msra.mxu0 0.0
  %187 = vmatprep.subr.mxu0 0.0
  %188 = vmatpush1.msra.mxu0 0.0
  %189 = vmatprep.subr.mxu0 0.0
  %190 = vmatpush1.msra.mxu0 0.0
  %191 = vmatprep.subr.mxu0 0.0
  %192 = vmatpush1.msra.mxu0 0.0
  %193 = vmatprep.subr.mxu0 0.0
  %194 = vmatpush1.msra.mxu0 0.0
  %195 = vmatprep.subr.mxu0 0.0
  %196 = vmatpush1.msra.mxu0 0.0
  %197 = vmatprep.subr.mxu0 0.0
  %198 = vmatpush1.msra.mxu0 0.0
  %199 = vmatprep.subr.mxu0 0.0
  %200 = vmatpush1.msra.mxu0 0.0
  %201 = vmatprep.subr.mxu0 0.0
  %202 = vmatpush1.msra.mxu0 0.0
  %203 = vmatprep.subr.mxu0 0.0
  %204 = vmatpush1.msra.mxu0 %v36
  %205 = vmatprep.subr.mxu0 0.0
  %206 = vmatpush2.msra.mxu0 0.0
  %207 = vmatprep.subr.mxu0 0.0
  %208 = vmatpush2.msra.mxu0 0.0
  %209 = vmatprep.subr.mxu0 0.0
  %210 = vmatpush2.msra.mxu0 0.0
  %211 = vmatprep.subr.mxu0 0.0
  %212 = vmatpush2.msra.mxu0 0.0
  %213 = vmatprep.subr.mxu0 0.0
  %214 = vmatpush2.msra.mxu0 0.0
  %215 = vmatprep.subr.mxu0 0.0
  %216 = vmatpush2.msra.mxu0 0.0
  %217 = vmatprep.subr.mxu0 0.0
  %218 = vmatpush2.msra.mxu0 0.0
  %219 = vmatprep.subr.mxu0 0.0
  %220 = vmatpush2.msra.mxu0 0.0
  %221 = vmatprep.subr.mxu0 0.0
  %222 = vmatpush2.msra.mxu0 0.0
  %223 = vmatprep.subr.mxu0 0.0
  %224 = vmatpush2.msra.mxu0 0.0
  %225 = vmatprep.subr.mxu0 0.0
  %226 = vmatpush2.msra.mxu0 0.0
  %227 = vmatprep.subr.mxu0 0.0
  %228 = vmatpush2.msra.mxu0 0.0
  %229 = vmatprep.subr.mxu0 0.0
  %230 = vmatpush2.msra.mxu0 0.0
  %231 = vmatprep.subr.mxu0 0.0
  %232 = vmatpush2.msra.mxu0 0.0
  %233 = vmatprep.subr.mxu0 0.0
  %234 = vmatpush2.msra.mxu0 0.0
  %235 = vmatprep.subr.mxu0 0.0
  %236 = vmatpush2.msra.mxu0 0.0
  %237 = vmatprep.mubr.f32.mxu0 0.0
  %238 = vmatmul.mubr.f32.gmra.mxu0 %v171
  %v239 = vpop.f32.mrf.mxu0
  %v240 = vadd.f32 0.0, %v239
  %v241 = vpop.f32.mrf.mxu0
  %242 = vdwg.mxu0
  %244 = vset.pattern.permute.xlu0 0
  %245 = vperm.xlu0 %244, %v161
  %v246 = vpop.permute.xlu0 %245
  %v247 = vlaneseq
  %v248 = vshrl.u32 %v247, 7
  %v249 = vsub.s32 %v72, %v248
  %v250 = vrot.slane %v246, %v249
  %v251 = vsel %vm170, %v250, 0
  %253 = vmatprep.subr.mxu0 0.0
  %254 = vmatpush1.msra.mxu0 0.0
  %255 = vmatprep.subr.mxu0 0.0
  %256 = vmatpush1.msra.mxu0 0.0
  %257 = vmatprep.subr.mxu0 0.0
  %258 = vmatpush1.msra.mxu0 0.0
  %259 = vmatprep.subr.mxu0 0.0
  %260 = vmatpush1.msra.mxu0 0.0
  %261 = vmatprep.subr.mxu0 0.0
  %262 = vmatpush1.msra.mxu0 0.0
  %263 = vmatprep.subr.mxu0 0.0
  %264 = vmatpush1.msra.mxu0 0.0
  %265 = vmatprep.subr.mxu0 0.0
  %266 = vmatpush1.msra.mxu0 0.0
  %267 = vmatprep.subr.mxu0 0.0
  %268 = vmatpush1.msra.mxu0 0.0
  %269 = vmatprep.subr.mxu0 0.0
  %270 = vmatpush1.msra.mxu0 0.0
  %271 = vmatprep.subr.mxu0 0.0
  %272 = vmatpush1.msra.mxu0 0.0
  %273 = vmatprep.subr.mxu0 0.0
  %274 = vmatpush1.msra.mxu0 0.0
  %275 = vmatprep.subr.mxu0 0.0
  %276 = vmatpush1.msra.mxu0 0.0
  %277 = vmatprep.subr.mxu0 0.0
  %278 = vmatpush1.msra.mxu0 0.0
  %279 = vmatprep.subr.mxu0 0.0
  %280 = vmatpush1.msra.mxu0 0.0
  %281 = vmatprep.subr.mxu0 0.0
  %282 = vmatpush1.msra.mxu0 0.0
  %283 = vmatprep.subr.mxu0 0.0
  %284 = vmatpush1.msra.mxu0 %v37
  %285 = vmatprep.subr.mxu0 0.0
  %286 = vmatpush2.msra.mxu0 0.0
  %287 = vmatprep.subr.mxu0 0.0
  %288 = vmatpush2.msra.mxu0 0.0
  %289 = vmatprep.subr.mxu0 0.0
  %290 = vmatpush2.msra.mxu0 0.0
  %291 = vmatprep.subr.mxu0 0.0
  %292 = vmatpush2.msra.mxu0 0.0
  %293 = vmatprep.subr.mxu0 0.0
  %294 = vmatpush2.msra.mxu0 0.0
  %295 = vmatprep.subr.mxu0 0.0
  %296 = vmatpush2.msra.mxu0 0.0
  %297 = vmatprep.subr.mxu0 0.0
  %298 = vmatpush2.msra.mxu0 0.0
  %299 = vmatprep.subr.mxu0 0.0
  %300 = vmatpush2.msra.mxu0 0.0
  %301 = vmatprep.subr.mxu0 0.0
  %302 = vmatpush2.msra.mxu0 0.0
  %303 = vmatprep.subr.mxu0 0.0
  %304 = vmatpush2.msra.mxu0 0.0
  %305 = vmatprep.subr.mxu0 0.0
  %306 = vmatpush2.msra.mxu0 0.0
  %307 = vmatprep.subr.mxu0 0.0
  %308 = vmatpush2.msra.mxu0 0.0
  %309 = vmatprep.subr.mxu0 0.0
  %310 = vmatpush2.msra.mxu0 0.0
  %311 = vmatprep.subr.mxu0 0.0
  %312 = vmatpush2.msra.mxu0 0.0
  %313 = vmatprep.subr.mxu0 0.0
  %314 = vmatpush2.msra.mxu0 0.0
  %315 = vmatprep.subr.mxu0 0.0
  %316 = vmatpush2.msra.mxu0 0.0
  %317 = vmatprep.mubr.f32.mxu0 0.0
  %318 = vmatmul.mubr.f32.gmra.mxu0 %v251
  %v319 = vpop.f32.mrf.mxu0
  %v320 = vadd.f32 0.0, %v319
  %v321 = vpop.f32.mrf.mxu0
  %322 = vdwg.mxu0
  %v323 = vld [vmem:[%s2] sm:$0xf]
  %v324 = vld [vmem:[%s2 + $0x4] sm:$0xf]
  %v325 = vld [vmem:[%s7] sm:$0x1]
  %s326 = sadd.s32 %s43, 1
  %s327 = sld [smem:[#allocation3 + %s326]]
  %v328 = vstv %s327
  %v329 = vsel %vm42, %v328, 0
  %s330 = sadd.s32 %s49, 1
  %s331 = sld [smem:[#allocation3 + %s330]]
  %v332 = vstv %s331
  %v333 = vsel %vm47, %v332, 0
  %v334 = vadd.s32 %v329, %v333
  %v336 = vlaneseq
  %v337 = vshrl.u32 %v336, 7
  %v338 = vsub.s32 0, %v337
  %v339 = vrot.slane %v325, %v338
  %v341 = vmul.f32 %v323, %v339
  %v342 = vmul.f32 %v324, %v339
  %vm343 = vcmask 125952
  %v344 = vsel %vm343, %v341, 0.0
  %345 = vadd.xlane.f32.xlu0 %v344
  %v346 = vpop.xlane.xlu0 %345
  %v347 = vsel %vm343, %v342, 0.0
  %348 = vadd.xlane.f32.xlu0 %v347
  %v349 = vpop.xlane.xlu0 %348
  %v352 = vlaneseq
  %v353 = vshrl.u32 %v352, 7
  %v354 = vsub.s32 %v72, %v353
  %v355 = vrot.slane %v346, %v354
  %v356 = vlaneseq
  %v357 = vshrl.u32 %v356, 7
  %v358 = vsub.s32 %v72, %v357
  %v359 = vrot.slane %v349, %v358
  %v360 = vsel %vm81, %v359, %v355
  %vm362 = vcmask 25600
  %v363 = vsel %vm362, %v360, -inf
  %364 = vmax.xlane.f32.xlu0 %v363
  %v365 = vpop.xlane.xlu0 %364
  %v367 = vlaneseq
  %v368 = vshrl.u32 %v367, 7
  %v369 = vsub.s32 0, %v368
  %v370 = vrot.slane %v365, %v369
  %v371 = vlaneseq
  %v372 = vshrl.u32 %v371, 7
  %v373 = vsub.s32 1, %v372
  %v374 = vrot.slane %v365, %v373
  %v377 = vsub.f32 %v346, %v370
  %v378 = vsub.f32 %v349, %v374
  %v379 = vmul.f32 %v377, 1.442695
  %v380 = vpow.pop %v379
  %v381 = vmul.f32 %v378, 1.442695
  %v382 = vpow.pop %v381
  %vm383 = vcmp.lt.s32.totalorder %v72, %v334
  %v384 = vsel %vm383, 1, 0
  %v385 = vcvt.s32.f32 %v384
  %v387 = vlaneseq
  %v388 = vshrl.u32 %v387, 7
  %v389 = vsub.s32 0, %v388
  %v390 = vrot.slane %v385, %v389
  %392 = vbcast.lane.b32.xlu0 %v390, 256
  %v393 = vpop.permute.xlu0 %392
  %v394 = vlaneseq
  %v395 = vshrl.u32 %v394, 7
  %v396 = vsub.s32 1, %v395
  %v397 = vrot.slane %v385, %v396
  %399 = vbcast.lane.b32.xlu0 %v397, 256
  %v400 = vpop.permute.xlu0 %399
  %v403 = vmul.f32 %v380, %v393
  %v404 = vmul.f32 %v382, %v400
  %407 = vset.pattern.permute.xlu0 0
  %408 = vperm.xlu0 %407, %v403
  %v409 = vpop.permute.xlu0 %408
  %410 = vset.pattern.permute.xlu0 0
  %411 = vperm.xlu0 %410, %v404
  %v412 = vpop.permute.xlu0 %411
  %v413 = vlaneseq
  %v414 = vshrl.u32 %v413, 7
  %v415 = vsub.s32 %v72, %v414
  %v416 = vrot.slane %v409, %v415
  %v417 = vlaneseq
  %v418 = vshrl.u32 %v417, 7
  %v419 = vsub.s32 %v72, %v418
  %v420 = vrot.slane %v412, %v419
  %v421 = vsel %vm81, %v420, %v416
  %v423 = vsel %vm362, %v421, 0.0
  %424 = vadd.xlane.f32.xlu0 %v423
  %v425 = vpop.xlane.xlu0 %424
  %v426 = vrcp.pop %v425
  %v428 = vlaneseq
  %v429 = vshrl.u32 %v428, 7
  %v430 = vsub.s32 0, %v429
  %v431 = vrot.slane %v426, %v430
  %v432 = vlaneseq
  %v433 = vshrl.u32 %v432, 7
  %v434 = vsub.s32 1, %v433
  %v435 = vrot.slane %v426, %v434
  %v438 = vmul.f32 %v403, %v431
  %v439 = vmul.f32 %v404, %v435
  %441 = vset.pattern.permute.xlu0 0
  %442 = vperm.xlu0 %441, %v438
  %v443 = vpop.permute.xlu0 %442
  %v444 = vlaneseq
  %v445 = vshrl.u32 %v444, 7
  %v446 = vsub.s32 %v72, %v445
  %v447 = vrot.slane %v443, %v446
  %vm448 = vcmask 31744
  %v449 = vsel %vm448, %v447, 0
  %vm451 = vcmask 1043456
  %v453 = vsel %vm451, %v323, 0
  %455 = vmatprep.subr.mxu0 0.0
  %456 = vmatpush1.msra.mxu0 0.0
  %457 = vmatprep.subr.mxu0 0.0
  %458 = vmatpush1.msra.mxu0 0.0
  %459 = vmatprep.subr.mxu0 0.0
  %460 = vmatpush1.msra.mxu0 0.0
  %461 = vmatprep.subr.mxu0 0.0
  %462 = vmatpush1.msra.mxu0 0.0
  %463 = vmatprep.subr.mxu0 0.0
  %464 = vmatpush1.msra.mxu0 0.0
  %465 = vmatprep.subr.mxu0 0.0
  %466 = vmatpush1.msra.mxu0 0.0
  %467 = vmatprep.subr.mxu0 0.0
  %468 = vmatpush1.msra.mxu0 0.0
  %469 = vmatprep.subr.mxu0 0.0
  %470 = vmatpush1.msra.mxu0 0.0
  %471 = vmatprep.subr.mxu0 0.0
  %472 = vmatpush1.msra.mxu0 0.0
  %473 = vmatprep.subr.mxu0 0.0
  %474 = vmatpush1.msra.mxu0 0.0
  %475 = vmatprep.subr.mxu0 0.0
  %476 = vmatpush1.msra.mxu0 0.0
  %477 = vmatprep.subr.mxu0 0.0
  %478 = vmatpush1.msra.mxu0 0.0
  %479 = vmatprep.subr.mxu0 0.0
  %480 = vmatpush1.msra.mxu0 0.0
  %481 = vmatprep.subr.mxu0 0.0
  %482 = vmatpush1.msra.mxu0 0.0
  %483 = vmatprep.subr.mxu0 0.0
  %484 = vmatpush1.msra.mxu0 0.0
  %485 = vmatprep.subr.mxu0 0.0
  %486 = vmatpush1.msra.mxu0 %v453
  %487 = vmatprep.subr.mxu0 0.0
  %488 = vmatpush2.msra.mxu0 0.0
  %489 = vmatprep.subr.mxu0 0.0
  %490 = vmatpush2.msra.mxu0 0.0
  %491 = vmatprep.subr.mxu0 0.0
  %492 = vmatpush2.msra.mxu0 0.0
  %493 = vmatprep.subr.mxu0 0.0
  %494 = vmatpush2.msra.mxu0 0.0
  %495 = vmatprep.subr.mxu0 0.0
  %496 = vmatpush2.msra.mxu0 0.0
  %497 = vmatprep.subr.mxu0 0.0
  %498 = vmatpush2.msra.mxu0 0.0
  %499 = vmatprep.subr.mxu0 0.0
  %500 = vmatpush2.msra.mxu0 0.0
  %501 = vmatprep.subr.mxu0 0.0
  %502 = vmatpush2.msra.mxu0 0.0
  %503 = vmatprep.subr.mxu0 0.0
  %504 = vmatpush2.msra.mxu0 0.0
  %505 = vmatprep.subr.mxu0 0.0
  %506 = vmatpush2.msra.mxu0 0.0
  %507 = vmatprep.subr.mxu0 0.0
  %508 = vmatpush2.msra.mxu0 0.0
  %509 = vmatprep.subr.mxu0 0.0
  %510 = vmatpush2.msra.mxu0 0.0
  %511 = vmatprep.subr.mxu0 0.0
  %512 = vmatpush2.msra.mxu0 0.0
  %513 = vmatprep.subr.mxu0 0.0
  %514 = vmatpush2.msra.mxu0 0.0
  %515 = vmatprep.subr.mxu0 0.0
  %516 = vmatpush2.msra.mxu0 0.0
  %517 = vmatprep.subr.mxu0 0.0
  %518 = vmatpush2.msra.mxu0 0.0
  %519 = vmatprep.mubr.f32.mxu0 0.0
  %520 = vmatmul.mubr.f32.gmra.mxu0 %v449
  %v521 = vpop.f32.mrf.mxu0
  %v522 = vadd.f32 0.0, %v521
  %v523 = vpop.f32.mrf.mxu0
  %524 = vdwg.mxu0
  %526 = vset.pattern.permute.xlu0 0
  %527 = vperm.xlu0 %526, %v439
  %v528 = vpop.permute.xlu0 %527
  %v529 = vlaneseq
  %v530 = vshrl.u32 %v529, 7
  %v531 = vsub.s32 %v72, %v530
  %v532 = vrot.slane %v528, %v531
  %v533 = vsel %vm448, %v532, 0
  %v536 = vsel %vm451, %v324, 0
  %538 = vmatprep.subr.mxu0 0.0
  %539 = vmatpush1.msra.mxu0 0.0
  %540 = vmatprep.subr.mxu0 0.0
  %541 = vmatpush1.msra.mxu0 0.0
  %542 = vmatprep.subr.mxu0 0.0
  %543 = vmatpush1.msra.mxu0 0.0
  %544 = vmatprep.subr.mxu0 0.0
  %545 = vmatpush1.msra.mxu0 0.0
  %546 = vmatprep.subr.mxu0 0.0
  %547 = vmatpush1.msra.mxu0 0.0
  %548 = vmatprep.subr.mxu0 0.0
  %549 = vmatpush1.msra.mxu0 0.0
  %550 = vmatprep.subr.mxu0 0.0
  %551 = vmatpush1.msra.mxu0 0.0
  %552 = vmatprep.subr.mxu0 0.0
  %553 = vmatpush1.msra.mxu0 0.0
  %554 = vmatprep.subr.mxu0 0.0
  %555 = vmatpush1.msra.mxu0 0.0
  %556 = vmatprep.subr.mxu0 0.0
  %557 = vmatpush1.msra.mxu0 0.0
  %558 = vmatprep.subr.mxu0 0.0
  %559 = vmatpush1.msra.mxu0 0.0
  %560 = vmatprep.subr.mxu0 0.0
  %561 = vmatpush1.msra.mxu0 0.0
  %562 = vmatprep.subr.mxu0 0.0
  %563 = vmatpush1.msra.mxu0 0.0
  %564 = vmatprep.subr.mxu0 0.0
  %565 = vmatpush1.msra.mxu0 0.0
  %566 = vmatprep.subr.mxu0 0.0
  %567 = vmatpush1.msra.mxu0 0.0
  %568 = vmatprep.subr.mxu0 0.0
  %569 = vmatpush1.msra.mxu0 %v536
  %570 = vmatprep.subr.mxu0 0.0
  %571 = vmatpush2.msra.mxu0 0.0
  %572 = vmatprep.subr.mxu0 0.0
  %573 = vmatpush2.msra.mxu0 0.0
  %574 = vmatprep.subr.mxu0 0.0
  %575 = vmatpush2.msra.mxu0 0.0
  %576 = vmatprep.subr.mxu0 0.0
  %577 = vmatpush2.msra.mxu0 0.0
  %578 = vmatprep.subr.mxu0 0.0
  %579 = vmatpush2.msra.mxu0 0.0
  %580 = vmatprep.subr.mxu0 0.0
  %581 = vmatpush2.msra.mxu0 0.0
  %582 = vmatprep.subr.mxu0 0.0
  %583 = vmatpush2.msra.mxu0 0.0
  %584 = vmatprep.subr.mxu0 0.0
  %585 = vmatpush2.msra.mxu0 0.0
  %586 = vmatprep.subr.mxu0 0.0
  %587 = vmatpush2.msra.mxu0 0.0
  %588 = vmatprep.subr.mxu0 0.0
  %589 = vmatpush2.msra.mxu0 0.0
  %590 = vmatprep.subr.mxu0 0.0
  %591 = vmatpush2.msra.mxu0 0.0
  %592 = vmatprep.subr.mxu0 0.0
  %593 = vmatpush2.msra.mxu0 0.0
  %594 = vmatprep.subr.mxu0 0.0
  %595 = vmatpush2.msra.mxu0 0.0
  %596 = vmatprep.subr.mxu0 0.0
  %597 = vmatpush2.msra.mxu0 0.0
  %598 = vmatprep.subr.mxu0 0.0
  %599 = vmatpush2.msra.mxu0 0.0
  %600 = vmatprep.subr.mxu0 0.0
  %601 = vmatpush2.msra.mxu0 0.0
  %602 = vmatprep.mubr.f32.mxu0 0.0
  %603 = vmatmul.mubr.f32.gmra.mxu0 %v533
  %v604 = vpop.f32.mrf.mxu0
  %v605 = vadd.f32 0.0, %v604
  %v606 = vpop.f32.mrf.mxu0
  %607 = vdwg.mxu0
  %v608 = vld [vmem:[%s3] sm:$0xf]
  %v609 = vld [vmem:[%s3 + $0x4] sm:$0xf]
  %v610 = vld [vmem:[%s7] sm:$0x1]
  %s611 = sadd.s32 %s43, 2
  %s612 = sld [smem:[#allocation3 + %s611]]
  %v613 = vstv %s612
  %v614 = vsel %vm42, %v613, 0
  %s615 = sadd.s32 %s49, 2
  %s616 = sld [smem:[#allocation3 + %s615]]
  %v617 = vstv %s616
  %v618 = vsel %vm47, %v617, 0
  %v619 = vadd.s32 %v614, %v618
  %v621 = vlaneseq
  %v622 = vshrl.u32 %v621, 7
  %v623 = vsub.s32 0, %v622
  %v624 = vrot.slane %v610, %v623
  %v626 = vmul.f32 %v608, %v624
  %v627 = vmul.f32 %v609, %v624
  %v628 = vsel %vm343, %v626, 0.0
  %629 = vadd.xlane.f32.xlu0 %v628
  %v630 = vpop.xlane.xlu0 %629
  %v631 = vsel %vm343, %v627, 0.0
  %632 = vadd.xlane.f32.xlu0 %v631
  %v633 = vpop.xlane.xlu0 %632
  %v636 = vlaneseq
  %v637 = vshrl.u32 %v636, 7
  %v638 = vsub.s32 %v72, %v637
  %v639 = vrot.slane %v630, %v638
  %v640 = vlaneseq
  %v641 = vshrl.u32 %v640, 7
  %v642 = vsub.s32 %v72, %v641
  %v643 = vrot.slane %v633, %v642
  %v644 = vsel %vm81, %v643, %v639
  %v646 = vsel %vm362, %v644, -inf
  %647 = vmax.xlane.f32.xlu0 %v646
  %v648 = vpop.xlane.xlu0 %647
  %v650 = vlaneseq
  %v651 = vshrl.u32 %v650, 7
  %v652 = vsub.s32 0, %v651
  %v653 = vrot.slane %v648, %v652
  %v654 = vlaneseq
  %v655 = vshrl.u32 %v654, 7
  %v656 = vsub.s32 1, %v655
  %v657 = vrot.slane %v648, %v656
  %v660 = vsub.f32 %v630, %v653
  %v661 = vsub.f32 %v633, %v657
  %v662 = vmul.f32 %v660, 1.442695
  %v663 = vpow.pop %v662
  %v664 = vmul.f32 %v661, 1.442695
  %v665 = vpow.pop %v664
  %vm666 = vcmp.lt.s32.totalorder %v72, %v619
  %v667 = vsel %vm666, 1, 0
  %v668 = vcvt.s32.f32 %v667
  %v670 = vlaneseq
  %v671 = vshrl.u32 %v670, 7
  %v672 = vsub.s32 0, %v671
  %v673 = vrot.slane %v668, %v672
  %675 = vbcast.lane.b32.xlu0 %v673, 256
  %v676 = vpop.permute.xlu0 %675
  %v677 = vlaneseq
  %v678 = vshrl.u32 %v677, 7
  %v679 = vsub.s32 1, %v678
  %v680 = vrot.slane %v668, %v679
  %682 = vbcast.lane.b32.xlu0 %v680, 256
  %v683 = vpop.permute.xlu0 %682
  %v686 = vmul.f32 %v663, %v676
  %v687 = vmul.f32 %v665, %v683
  %690 = vset.pattern.permute.xlu0 0
  %691 = vperm.xlu0 %690, %v686
  %v692 = vpop.permute.xlu0 %691
  %693 = vset.pattern.permute.xlu0 0
  %694 = vperm.xlu0 %693, %v687
  %v695 = vpop.permute.xlu0 %694
  %v696 = vlaneseq
  %v697 = vshrl.u32 %v696, 7
  %v698 = vsub.s32 %v72, %v697
  %v699 = vrot.slane %v692, %v698
  %v700 = vlaneseq
  %v701 = vshrl.u32 %v700, 7
  %v702 = vsub.s32 %v72, %v701
  %v703 = vrot.slane %v695, %v702
  %v704 = vsel %vm81, %v703, %v699
  %v706 = vsel %vm362, %v704, 0.0
  %707 = vadd.xlane.f32.xlu0 %v706
  %v708 = vpop.xlane.xlu0 %707
  %v709 = vrcp.pop %v708
  %v711 = vlaneseq
  %v712 = vshrl.u32 %v711, 7
  %v713 = vsub.s32 0, %v712
  %v714 = vrot.slane %v709, %v713
  %v715 = vlaneseq
  %v716 = vshrl.u32 %v715, 7
  %v717 = vsub.s32 1, %v716
  %v718 = vrot.slane %v709, %v717
  %v721 = vmul.f32 %v686, %v714
  %v722 = vmul.f32 %v687, %v718
  %724 = vset.pattern.permute.xlu0 0
  %725 = vperm.xlu0 %724, %v721
  %v726 = vpop.permute.xlu0 %725
  %v727 = vlaneseq
  %v728 = vshrl.u32 %v727, 7
  %v729 = vsub.s32 %v72, %v728
  %v730 = vrot.slane %v726, %v729
  %v731 = vsel %vm448, %v730, 0
  %v734 = vsel %vm451, %v608, 0
  %736 = vmatprep.subr.mxu0 0.0
  %737 = vmatpush1.msra.mxu0 0.0
  %738 = vmatprep.subr.mxu0 0.0
  %739 = vmatpush1.msra.mxu0 0.0
  %740 = vmatprep.subr.mxu0 0.0
  %741 = vmatpush1.msra.mxu0 0.0
  %742 = vmatprep.subr.mxu0 0.0
  %743 = vmatpush1.msra.mxu0 0.0
  %744 = vmatprep.subr.mxu0 0.0
  %745 = vmatpush1.msra.mxu0 0.0
  %746 = vmatprep.subr.mxu0 0.0
  %747 = vmatpush1.msra.mxu0 0.0
  %748 = vmatprep.subr.mxu0 0.0
  %749 = vmatpush1.msra.mxu0 0.0
  %750 = vmatprep.subr.mxu0 0.0
  %751 = vmatpush1.msra.mxu0 0.0
  %752 = vmatprep.subr.mxu0 0.0
  %753 = vmatpush1.msra.mxu0 0.0
  %754 = vmatprep.subr.mxu0 0.0
  %755 = vmatpush1.msra.mxu0 0.0
  %756 = vmatprep.subr.mxu0 0.0
  %757 = vmatpush1.msra.mxu0 0.0
  %758 = vmatprep.subr.mxu0 0.0
  %759 = vmatpush1.msra.mxu0 0.0
  %760 = vmatprep.subr.mxu0 0.0
  %761 = vmatpush1.msra.mxu0 0.0
  %762 = vmatprep.subr.mxu0 0.0
  %763 = vmatpush1.msra.mxu0 0.0
  %764 = vmatprep.subr.mxu0 0.0
  %765 = vmatpush1.msra.mxu0 0.0
  %766 = vmatprep.subr.mxu0 0.0
  %767 = vmatpush1.msra.mxu0 %v734
  %768 = vmatprep.subr.mxu0 0.0
  %769 = vmatpush2.msra.mxu0 0.0
  %770 = vmatprep.subr.mxu0 0.0
  %771 = vmatpush2.msra.mxu0 0.0
  %772 = vmatprep.subr.mxu0 0.0
  %773 = vmatpush2.msra.mxu0 0.0
  %774 = vmatprep.subr.mxu0 0.0
  %775 = vmatpush2.msra.mxu0 0.0
  %776 = vmatprep.subr.mxu0 0.0
  %777 = vmatpush2.msra.mxu0 0.0
  %778 = vmatprep.subr.mxu0 0.0
  %779 = vmatpush2.msra.mxu0 0.0
  %780 = vmatprep.subr.mxu0 0.0
  %781 = vmatpush2.msra.mxu0 0.0
  %782 = vmatprep.subr.mxu0 0.0
  %783 = vmatpush2.msra.mxu0 0.0
  %784 = vmatprep.subr.mxu0 0.0
  %785 = vmatpush2.msra.mxu0 0.0
  %786 = vmatprep.subr.mxu0 0.0
  %787 = vmatpush2.msra.mxu0 0.0
  %788 = vmatprep.subr.mxu0 0.0
  %789 = vmatpush2.msra.mxu0 0.0
  %790 = vmatprep.subr.mxu0 0.0
  %791 = vmatpush2.msra.mxu0 0.0
  %792 = vmatprep.subr.mxu0 0.0
  %793 = vmatpush2.msra.mxu0 0.0
  %794 = vmatprep.subr.mxu0 0.0
  %795 = vmatpush2.msra.mxu0 0.0
  %796 = vmatprep.subr.mxu0 0.0
  %797 = vmatpush2.msra.mxu0 0.0
  %798 = vmatprep.subr.mxu0 0.0
  %799 = vmatpush2.msra.mxu0 0.0
  %800 = vmatprep.mubr.f32.mxu0 0.0
  %801 = vmatmul.mubr.f32.gmra.mxu0 %v731
  %v802 = vpop.f32.mrf.mxu0
  %v803 = vadd.f32 0.0, %v802
  %v804 = vpop.f32.mrf.mxu0
  %805 = vdwg.mxu0
  %807 = vset.pattern.permute.xlu0 0
  %808 = vperm.xlu0 %807, %v722
  %v809 = vpop.permute.xlu0 %808
  %v810 = vlaneseq
  %v811 = vshrl.u32 %v810, 7
  %v812 = vsub.s32 %v72, %v811
  %v813 = vrot.slane %v809, %v812
  %v814 = vsel %vm448, %v813, 0
  %v817 = vsel %vm451, %v609, 0
  %819 = vmatprep.subr.mxu0 0.0
  %820 = vmatpush1.msra.mxu0 0.0
  %821 = vmatprep.subr.mxu0 0.0
  %822 = vmatpush1.msra.mxu0 0.0
  %823 = vmatprep.subr.mxu0 0.0
  %824 = vmatpush1.msra.mxu0 0.0
  %825 = vmatprep.subr.mxu0 0.0
  %826 = vmatpush1.msra.mxu0 0.0
  %827 = vmatprep.subr.mxu0 0.0
  %828 = vmatpush1.msra.mxu0 0.0
  %829 = vmatprep.subr.mxu0 0.0
  %830 = vmatpush1.msra.mxu0 0.0
  %831 = vmatprep.subr.mxu0 0.0
  %832 = vmatpush1.msra.mxu0 0.0
  %833 = vmatprep.subr.mxu0 0.0
  %834 = vmatpush1.msra.mxu0 0.0
  %835 = vmatprep.subr.mxu0 0.0
  %836 = vmatpush1.msra.mxu0 0.0
  %837 = vmatprep.subr.mxu0 0.0
  %838 = vmatpush1.msra.mxu0 0.0
  %839 = vmatprep.subr.mxu0 0.0
  %840 = vmatpush1.msra.mxu0 0.0
  %841 = vmatprep.subr.mxu0 0.0
  %842 = vmatpush1.msra.mxu0 0.0
  %843 = vmatprep.subr.mxu0 0.0
  %844 = vmatpush1.msra.mxu0 0.0
  %845 = vmatprep.subr.mxu0 0.0
  %846 = vmatpush1.msra.mxu0 0.0
  %847 = vmatprep.subr.mxu0 0.0
  %848 = vmatpush1.msra.mxu0 0.0
  %849 = vmatprep.subr.mxu0 0.0
  %850 = vmatpush1.msra.mxu0 %v817
  %851 = vmatprep.subr.mxu0 0.0
  %852 = vmatpush2.msra.mxu0 0.0
  %853 = vmatprep.subr.mxu0 0.0
  %854 = vmatpush2.msra.mxu0 0.0
  %855 = vmatprep.subr.mxu0 0.0
  %856 = vmatpush2.msra.mxu0 0.0
  %857 = vmatprep.subr.mxu0 0.0
  %858 = vmatpush2.msra.mxu0 0.0
  %859 = vmatprep.subr.mxu0 0.0
  %860 = vmatpush2.msra.mxu0 0.0
  %861 = vmatprep.subr.mxu0 0.0
  %862 = vmatpush2.msra.mxu0 0.0
  %863 = vmatprep.subr.mxu0 0.0
  %864 = vmatpush2.msra.mxu0 0.0
  %865 = vmatprep.subr.mxu0 0.0
  %866 = vmatpush2.msra.mxu0 0.0
  %867 = vmatprep.subr.mxu0 0.0
  %868 = vmatpush2.msra.mxu0 0.0
  %869 = vmatprep.subr.mxu0 0.0
  %870 = vmatpush2.msra.mxu0 0.0
  %871 = vmatprep.subr.mxu0 0.0
  %872 = vmatpush2.msra.mxu0 0.0
  %873 = vmatprep.subr.mxu0 0.0
  %874 = vmatpush2.msra.mxu0 0.0
  %875 = vmatprep.subr.mxu0 0.0
  %876 = vmatpush2.msra.mxu0 0.0
  %877 = vmatprep.subr.mxu0 0.0
  %878 = vmatpush2.msra.mxu0 0.0
  %879 = vmatprep.subr.mxu0 0.0
  %880 = vmatpush2.msra.mxu0 0.0
  %881 = vmatprep.subr.mxu0 0.0
  %882 = vmatpush2.msra.mxu0 0.0
  %883 = vmatprep.mubr.f32.mxu0 0.0
  %884 = vmatmul.mubr.f32.gmra.mxu0 %v814
  %v885 = vpop.f32.mrf.mxu0
  %v886 = vadd.f32 0.0, %v885
  %v887 = vpop.f32.mrf.mxu0
  %888 = vdwg.mxu0
  %v889 = vld [vmem:[%s4] sm:$0x3]
  %v890 = vld [vmem:[%s5] sm:$0x3]
  %v893 = vrot.slane %v320, 7
  %v894 = vsel %vm81, %v893, %v240
  %897 = vrot.lane.b32.xlu0 %v889, 32
  %v898 = vpop.permute.xlu0 %897
  %v902 = vrot.slane %v605, 7
  %v903 = vsel %vm81, %v902, %v522
  %904 = vrot.lane.b32.xlu0 %v903, 48
  %v905 = vpop.permute.xlu0 %904
  %v909 = vrot.slane %v886, 7
  %v910 = vsel %vm81, %v909, %v803
  %911 = vrot.lane.b32.xlu0 %v910, 64
  %v912 = vpop.permute.xlu0 %911
  %915 = vrot.lane.b32.xlu0 %v890, 80
  %v916 = vpop.permute.xlu0 %915
  %v918 = vsel %vm62, %v894, %v898
  %vm919 = vcmask 392192
  %v920 = vsel %vm919, %v918, %v905
  %vm921 = vcmask 523264
  %v922 = vsel %vm921, %v920, %v912
  %vm923 = vcmask 654336
  %v924 = vsel %vm923, %v922, %v916
  %v925 = vld [vmem:[%s8] sm:$0xff]
  %v926 = vld [vmem:[%s8 + $0x8] sm:$0xff]
  %v927 = vld [vmem:[%s8 + $0x10] sm:$0xff]
  %v928 = vld [vmem:[%s8 + $0x18] sm:$0xff]
  %v929 = vld [vmem:[%s8 + $0x20] sm:$0xff]
  %v930 = vld [vmem:[%s8 + $0x28] sm:$0xff]
  %v931 = vld [vmem:[%s8 + $0x30] sm:$0xff]
  %v932 = vld [vmem:[%s8 + $0x38] sm:$0xff]
  %v933 = vld [vmem:[%s8 + $0x40] sm:$0xff]
  %v934 = vld [vmem:[%s8 + $0x48] sm:$0xff]
  %v935 = vld [vmem:[%s8 + $0x50] sm:$0xff]
  %v936 = vld [vmem:[%s8 + $0x58] sm:$0xff]
  %vm937 = vcmask 785408
  %v939 = vsel %vm937, %v924, 0
  %941 = vmatprep.subr.mxu0 0.0
  %942 = vmatpush1.msra.mxu0 0.0
  %943 = vmatprep.subr.mxu0 0.0
  %944 = vmatpush1.msra.mxu0 0.0
  %945 = vmatprep.subr.mxu0 0.0
  %946 = vmatpush1.msra.mxu0 0.0
  %947 = vmatprep.subr.mxu0 0.0
  %948 = vmatpush1.msra.mxu0 0.0
  %949 = vmatprep.subr.mxu0 0.0
  %950 = vmatpush1.msra.mxu0 %v936
  %951 = vmatprep.subr.mxu0 0.0
  %952 = vmatpush1.msra.mxu0 %v935
  %953 = vmatprep.subr.mxu0 0.0
  %954 = vmatpush1.msra.mxu0 %v934
  %955 = vmatprep.subr.mxu0 0.0
  %956 = vmatpush1.msra.mxu0 %v933
  %957 = vmatprep.subr.mxu0 0.0
  %958 = vmatpush1.msra.mxu0 %v932
  %959 = vmatprep.subr.mxu0 0.0
  %960 = vmatpush1.msra.mxu0 %v931
  %961 = vmatprep.subr.mxu0 0.0
  %962 = vmatpush1.msra.mxu0 %v930
  %963 = vmatprep.subr.mxu0 0.0
  %964 = vmatpush1.msra.mxu0 %v929
  %965 = vmatprep.subr.mxu0 0.0
  %966 = vmatpush1.msra.mxu0 %v928
  %967 = vmatprep.subr.mxu0 0.0
  %968 = vmatpush1.msra.mxu0 %v927
  %969 = vmatprep.subr.mxu0 0.0
  %970 = vmatpush1.msra.mxu0 %v926
  %971 = vmatprep.subr.mxu0 0.0
  %972 = vmatpush1.msra.mxu0 %v925
  %973 = vmatprep.subr.mxu0 0.0
  %974 = vmatpush2.msra.mxu0 0.0
  %975 = vmatprep.subr.mxu0 0.0
  %976 = vmatpush2.msra.mxu0 0.0
  %977 = vmatprep.subr.mxu0 0.0
  %978 = vmatpush2.msra.mxu0 0.0
  %979 = vmatprep.subr.mxu0 0.0
  %980 = vmatpush2.msra.mxu0 0.0
  %981 = vmatprep.subr.mxu0 0.0
  %982 = vmatpush2.msra.mxu0 0.0
  %983 = vmatprep.subr.mxu0 0.0
  %984 = vmatpush2.msra.mxu0 0.0
  %985 = vmatprep.subr.mxu0 0.0
  %986 = vmatpush2.msra.mxu0 0.0
  %987 = vmatprep.subr.mxu0 0.0
  %988 = vmatpush2.msra.mxu0 0.0
  %989 = vmatprep.subr.mxu0 0.0
  %990 = vmatpush2.msra.mxu0 0.0
  %991 = vmatprep.subr.mxu0 0.0
  %992 = vmatpush2.msra.mxu0 0.0
  %993 = vmatprep.subr.mxu0 0.0
  %994 = vmatpush2.msra.mxu0 0.0
  %995 = vmatprep.subr.mxu0 0.0
  %996 = vmatpush2.msra.mxu0 0.0
  %997 = vmatprep.subr.mxu0 0.0
  %998 = vmatpush2.msra.mxu0 0.0
  %999 = vmatprep.subr.mxu0 0.0
  %1000 = vmatpush2.msra.mxu0 0.0
  %1001 = vmatprep.subr.mxu0 0.0
  %1002 = vmatpush2.msra.mxu0 0.0
  %1003 = vmatprep.subr.mxu0 0.0
  %1004 = vmatpush2.msra.mxu0 0.0
  %1005 = vmatprep.mubr.f32.mxu0 0.0
  %1006 = vmatmul.mubr.f32.gmra.mxu0 %v939
  %v1007 = vpop.f32.mrf.mxu0
  %v1008 = vadd.f32 0.0, %v1007
  %v1009 = vpop.f32.mrf.mxu0
  %1010 = vdwg.mxu0
  %vm1011 = vcmp.lt.s32.totalorder %v72, 5
  %v1012 = vsel %vm1011, %v1008, -3.4028235e+38
  %vm1013 = vcmask 1041408
  %v1014 = vsel %vm1013, %v1012, -inf
  %1015 = vmax.xlane.f32.xlu0 %v1014
  %v1016 = vpop.xlane.xlu0 %1015
  %vm1017 = vcmp.eq.f32.partialorder %v1012, %v1016
  %v1018 = vsel %vm1017, %v72, 128
  %v1019 = vsel %vm1013, %v1018, 2147483647
  %v1020 = vand.u32 %v1019, 65535
  %v1021 = vshra.s32 %v1019, 16
  %v1022 = vcvt.s32.f32 %v1020
  %v1023 = vcvt.s32.f32 %v1021
  %1024 = vmin.xlane.f32.xlu0 %v1023
  %v1025 = vpop.xlane.xlu0 %1024
  %vm1026 = vcmp.eq.f32.partialorder %v1023, %v1025
  %v1027 = vsel %vm1026, %v1022, inf
  %1028 = vmin.xlane.f32.xlu0 %v1027
  %v1029 = vpop.xlane.xlu0 %1028
  %v1030 = vcvt.f32.s32 %v1029
  %v1031 = vcvt.f32.s32 %v1025
  %v1032 = vshll.u32 %v1031, 16
  %v1033 = vadd.s32 %v1032, %v1030
  %1034 = vst [vmem:[%s9] sm:$0x3] %v1033
  // Predicated region
  $region34: #{classify_forward.1} parent=0 // pred_check
    _
  $region35: #{classify_forward.1} parent=0 // pred_check_branch
    %1036 = sbr.rel (0) target = $region37
  $region36: #{classify_forward.1} parent=0 // pred_region
    _
  $region37: #{classify_forward.1} parent=0 // pred_fallthru
    _
  // Predicated region
  $region38: #{classify_forward.1} parent=0 // pred_check
    _
  $region39: #{classify_forward.1} parent=0 // pred_check_branch
    %1038 = sbr.rel (0) target = $region41
  $region40: #{classify_forward.1} parent=0 // pred_region
    _
  $region41: #{classify_forward.1} parent=0 // pred_fallthru
    _

</llo_original>
